<compile_context>
chip_gen: v6e
topology: v6e:2x2x1
jax: 0.10.0
libtpu: 0.0.40
codegen_flags: <defaults>
</compile_context>

<pallas_src>
import functools

import jax
import jax.numpy as jnp
from jax.experimental import pallas as pl
from jax.experimental.pallas import tpu as pltpu


def vae_kernel(x_ref, eps_ref, w1_ref, wh_ref, w3_ref, w4_ref, bias_ref,
               out_ref, *, obs_dim, z_dim, hidden):
    # Biases, sliced from the packed [4, max_width] f32 buffer (static offsets).
    b1 = bias_ref[0:1, :hidden]            # fc1 bias
    bh = bias_ref[1:2, :2 * z_dim]         # [b_mu | b_log_std]
    b3 = bias_ref[2:3, :hidden]            # fc3 bias
    b4 = bias_ref[3:4, :obs_dim]           # fc4 bias

    # No-op if the upstream producer already emits bf16 (preferred: halves the
    # x HBM read and per-step DMA).
    x = x_ref[...].astype(jnp.bfloat16)

    # --- encode ---
    h1 = jnp.dot(x, w1_ref[...], preferred_element_type=jnp.float32) + b1
    h1 = jnp.maximum(h1, 0.0)                                        # relu

    # Fused mu / log_std heads: one f32 matmul into [tm, 2*z_dim].
    heads = jnp.dot(h1, wh_ref[...], preferred_element_type=jnp.float32) + bh
    mu = heads[:, :z_dim]
    log_std = heads[:, z_dim:]

    # --- reparametrize: z = mu + eps * exp(log_std) ---
    z = mu + eps_ref[...] * jnp.exp(log_std)

    # --- decode ---
    h3 = jnp.dot(z.astype(jnp.bfloat16), w3_ref[...],
                 preferred_element_type=jnp.float32) + b3
    h3 = jnp.maximum(h3, 0.0)                                        # relu
    logits = jnp.dot(h3.astype(jnp.bfloat16), w4_ref[...],
                     preferred_element_type=jnp.float32) + b4
    recon = jax.nn.sigmoid(logits)

    # Lane-dense slab store: direct slice writes, no concatenate temp.
    # (Columns beyond obs_dim + 2*z_dim are padding; never read back.)
    out_ref[:, :obs_dim] = recon
    out_ref[:, obs_dim:obs_dim + 2 * z_dim] = heads


def pack_params(params):
    """One-time packing: bf16 weight casts, fused head weights, packed biases.

    Call once outside the hot path (avoids re-doing these HBM passes per step).
    """
    obs_dim, hidden = params["w1"].shape
    z_dim = params["w_mu"].shape[1]

    bw = max(hidden, 2 * z_dim, obs_dim)
    bias = jnp.zeros((4, bw), jnp.float32)
    bias = bias.at[0, :hidden].set(params["b1"].reshape(-1))
    bias = bias.at[1, :z_dim].set(params["b_mu"].reshape(-1))
    bias = bias.at[1, z_dim:2 * z_dim].set(params["b_ls"].reshape(-1))
    bias = bias.at[2, :hidden].set(params["b3"].reshape(-1))
    bias = bias.at[3, :obs_dim].set(params["b4"].reshape(-1))

    return dict(
        w1=params["w1"].astype(jnp.bfloat16),
        # Head weights kept f32 (tiny, and mu/log_std accuracy matters for KL).
        w_heads=jnp.concatenate([params["w_mu"], params["w_ls"]], axis=1),
        w3=params["w3"].astype(jnp.bfloat16),
        w4=params["w4"].astype(jnp.bfloat16),
        bias=bias,
        dims=(obs_dim, z_dim, hidden),
    )


def _pick_tm(batch, tm):
    if tm is not None:
        return tm
    # Per-row VMEM cost is ~5 KB (f32 h1/h3 temps dominate; weights < 200 KB),
    # so fat tiles amortize the ~0.35 us/step pipeline overhead.  Sweep
    # 512/1024/2048 in prod; on v7x with very large B pass tm ~= B/8 explicitly
    # so both TensorCores get >= ~4 steps each.
    cap = 1024
    if batch <= cap:
        return batch                       # one full-height block, no padding
    for d in range(cap, 15, -1):           # largest divisor of B <= cap, mult of 16
        if batch % d == 0 and d % 16 == 0:
            return d
    return cap                             # rare fallback: ragged -> wrapper pads


def vae_forward(x, eps, packed, *, tm=None):
    """x: [B, obs_dim] (f32 or bf16), eps: [B, z_dim] f32, packed: pack_params()."""
    obs_dim, z_dim, hidden = packed["dims"]
    B = x.shape[0]
    assert x.shape == (B, obs_dim) and eps.shape == (B, z_dim)

    tm = _pick_tm(B, tm)
    b_pad = pl.cdiv(B, tm) * tm
    if b_pad != B:
        # Fallback only (no clean divisor of B).  Pad value 0 keeps throwaway
        # rows finite: h1 = relu(b1), exp(log_std) stays bounded; rows sliced off.
        x = jnp.pad(x, ((0, b_pad - B), (0, 0)))
        eps = jnp.pad(eps, ((0, b_pad - B), (0, 0)))

    out_w = obs_dim + 2 * z_dim
    out_w_pad = pl.cdiv(out_w, 128) * 128      # lane-dense HBM writeback
    bw = packed["bias"].shape[1]

    kernel = functools.partial(vae_kernel, obs_dim=obs_dim, z_dim=z_dim,
                               hidden=hidden)

    out = pl.pallas_call(
        kernel,
        out_shape=jax.ShapeDtypeStruct((b_pad, out_w_pad), jnp.float32),
        grid=(b_pad // tm,),
        in_specs=[
            pl.BlockSpec((tm, obs_dim), lambda i: (i, 0)),        # x (batch-tiled)
            pl.BlockSpec((tm, z_dim), lambda i: (i, 0)),          # eps (batch-tiled)
            pl.BlockSpec((obs_dim, hidden), lambda i: (0, 0)),    # w1 (resident)
            pl.BlockSpec((hidden, 2 * z_dim), lambda i: (0, 0)),  # fused heads (f32)
            pl.BlockSpec((z_dim, hidden), lambda i: (0, 0)),      # w3
            pl.BlockSpec((hidden, obs_dim), lambda i: (0, 0)),    # w4
            pl.BlockSpec((4, bw), lambda i: (0, 0)),              # packed biases
        ],
        out_specs=pl.BlockSpec((tm, out_w_pad), lambda i: (i, 0)),
        compiler_params=pltpu.CompilerParams(
            dimension_semantics=("parallel",),
            vmem_limit_bytes=32 * 1024 * 1024,
        ),
    )(x, eps, packed["w1"], packed["w_heads"], packed["w3"], packed["w4"],
      packed["bias"])

    recon = out[:B, :obs_dim]
    mu = out[:B, obs_dim:obs_dim + z_dim]
    log_std = out[:B, obs_dim + z_dim:out_w]
    return recon, mu, log_std


def init_params(key, obs_dim, z_dim, hidden=512):
    """Deterministic init mimicking PyTorch nn.Linear default (U[-1/sqrt(fan_in), +])."""
    def linear(k, fan_in, fan_out):
        kw, kb = jax.random.split(k)
        bound = 1.0 / jnp.sqrt(fan_in)
        w = jax.random.uniform(kw, (fan_in, fan_out), jnp.float32, -bound, bound)
        b = jax.random.uniform(kb, (1, fan_out), jnp.float32, -bound, bound)
        return w, b

    k1, k2, k3, k4, k5 = jax.random.split(key, 5)
    w1, b1 = linear(k1, obs_dim, hidden)
    w_mu, b_mu = linear(k2, hidden, z_dim)
    w_ls, b_ls = linear(k3, hidden, z_dim)
    w3, b3 = linear(k4, z_dim, hidden)
    w4, b4 = linear(k5, hidden, obs_dim)
    return dict(w1=w1, b1=b1, w_mu=w_mu, b_mu=b_mu, w_ls=w_ls, b_ls=b_ls,
                w3=w3, b3=b3, w4=w4, b4=b4)


def vae_forward_ref(x, eps, p):
    """Pure-JAX f32 reference of the PyTorch forward."""
    h1 = jnp.maximum(x @ p["w1"] + p["b1"], 0.0)
    mu = h1 @ p["w_mu"] + p["b_mu"]
    log_std = h1 @ p["w_ls"] + p["b_ls"]
    z = mu + eps * jnp.exp(log_std)
    h3 = jnp.maximum(z @ p["w3"] + p["b3"], 0.0)
    recon = jax.nn.sigmoid(h3 @ p["w4"] + p["b4"])
    return recon, mu, log_std


if __name__ == "__main__":
    B, OBS_DIM, Z_DIM = 8, 32, 16          # hidden=512 fixed by the module spec

    key = jax.random.PRNGKey(0)
    k_params, k_x, k_eps = jax.random.split(key, 3)

    params = init_params(k_params, OBS_DIM, Z_DIM)
    packed = pack_params(params)                      # hoisted: done once
    x = jax.random.normal(k_x, (B, OBS_DIM), jnp.float32)
    eps = jax.random.normal(k_eps, (B, Z_DIM), jnp.float32)   # torch.randn_like(std)

    recon, mu, log_std = jax.block_until_ready(vae_forward(x, eps, packed))

    # sanity check against pure-JAX f32 reference (w1/w3/w4 are bf16 in-kernel,
    # so use a bf16-appropriate tolerance)
    r_ref, mu_ref, ls_ref = vae_forward_ref(x, eps, params)
    assert recon.shape == (B, OBS_DIM) and mu.shape == (B, Z_DIM) and log_std.shape == (B, Z_DIM)
    assert jnp.allclose(recon, r_ref, atol=5e-2, rtol=5e-2)
    assert jnp.allclose(mu, mu_ref, atol=5e-2, rtol=5e-2)
    assert jnp.allclose(log_std, ls_ref, atol=5e-2, rtol=5e-2)

    print("KERNEL_OK")
</pallas_src>

<mosaic_0001>
module attributes {stable_mosaic.version = 11 : i64} {
  func.func @vae_kernel(%arg0: i32, %arg1: memref<8x32xf32, #tpu.memory_space<vmem>>, %arg2: memref<8x16xf32, #tpu.memory_space<vmem>>, %arg3: memref<32x512xbf16, #tpu.memory_space<vmem>>, %arg4: memref<512x32xf32, #tpu.memory_space<vmem>>, %arg5: memref<16x512xbf16, #tpu.memory_space<vmem>>, %arg6: memref<512x32xbf16, #tpu.memory_space<vmem>>, %arg7: memref<4x512xf32, #tpu.memory_space<vmem>>, %arg8: memref<8x128xf32, #tpu.memory_space<vmem>>) attributes {dimension_semantics = [#tpu.dimension_semantics<parallel>], iteration_bounds = array<i64: 1>, scalar_prefetch = 0 : i64, scratch_operands = 0 : i64, tpu.core_type = #tpu.core_type<tc>, window_params = [{transform_indices = @transform_0, window_bounds = array<i64: 8, 32>}, {transform_indices = @transform_1, window_bounds = array<i64: 8, 16>}, {pipeline_mode = #tpu.pipeline_mode<synchronous>, transform_indices = @transform_2, window_bounds = array<i64: 32, 512>}, {pipeline_mode = #tpu.pipeline_mode<synchronous>, transform_indices = @transform_3, window_bounds = array<i64: 512, 32>}, {pipeline_mode = #tpu.pipeline_mode<synchronous>, transform_indices = @transform_4, window_bounds = array<i64: 16, 512>}, {pipeline_mode = #tpu.pipeline_mode<synchronous>, transform_indices = @transform_5, window_bounds = array<i64: 512, 32>}, {pipeline_mode = #tpu.pipeline_mode<synchronous>, transform_indices = @transform_6, window_bounds = array<i64: 4, 512>}, {transform_indices = @transform_7, window_bounds = array<i64: 8, 128>}]} {
    %c0 = arith.constant 0 : index
    %c0_0 = arith.constant 0 : index
    %0 = vector.load %arg7[%c0, %c0_0] : memref<4x512xf32, #tpu.memory_space<vmem>>, vector<1x512xf32>
    %c1 = arith.constant 1 : index
    %c0_1 = arith.constant 0 : index
    %1 = vector.load %arg7[%c1, %c0_1] : memref<4x512xf32, #tpu.memory_space<vmem>>, vector<1x32xf32>
    %c2 = arith.constant 2 : index
    %c0_2 = arith.constant 0 : index
    %2 = vector.load %arg7[%c2, %c0_2] : memref<4x512xf32, #tpu.memory_space<vmem>>, vector<1x512xf32>
    %c3 = arith.constant 3 : index
    %c0_3 = arith.constant 0 : index
    %3 = vector.load %arg7[%c3, %c0_3] : memref<4x512xf32, #tpu.memory_space<vmem>>, vector<1x32xf32>
    %c0_4 = arith.constant 0 : index
    %c0_5 = arith.constant 0 : index
    %4 = vector.load %arg1[%c0_4, %c0_5] : memref<8x32xf32, #tpu.memory_space<vmem>>, vector<8x32xf32>
    %5 = arith.truncf %4 : vector<8x32xf32> to vector<8x32xbf16>
    %c0_6 = arith.constant 0 : index
    %c0_7 = arith.constant 0 : index
    %6 = vector.load %arg3[%c0_6, %c0_7] : memref<32x512xbf16, #tpu.memory_space<vmem>>, vector<32x512xbf16>
    %cst = arith.constant dense<0.000000e+00> : vector<8x512xf32>
    %7 = tpu.matmul %5, %6, %cst {dimension_numbers = #tpu.dot_dimension_numbers<[1], [0], [0], [1], [0, 0, 1, 1], [], []>} : vector<8x32xbf16>, vector<32x512xbf16>, vector<8x512xf32> -> vector<8x512xf32>
    %8 = vector.broadcast %0 : vector<1x512xf32> to vector<8x512xf32>
    %9 = arith.addf %7, %8 : vector<8x512xf32>
    %cst_8 = arith.constant 0.000000e+00 : f32
    %10 = vector.broadcast %cst_8 : f32 to vector<8x512xf32>
    %11 = arith.maximumf %9, %10 : vector<8x512xf32>
    %c0_9 = arith.constant 0 : index
    %c0_10 = arith.constant 0 : index
    %12 = vector.load %arg4[%c0_9, %c0_10] : memref<512x32xf32, #tpu.memory_space<vmem>>, vector<512x32xf32>
    %cst_11 = arith.constant dense<0.000000e+00> : vector<8x32xf32>
    %13 = tpu.matmul %11, %12, %cst_11 {dimension_numbers = #tpu.dot_dimension_numbers<[1], [0], [0], [1], [0, 0, 1, 1], [], []>} : vector<8x512xf32>, vector<512x32xf32>, vector<8x32xf32> -> vector<8x32xf32>
    %14 = vector.broadcast %1 : vector<1x32xf32> to vector<8x32xf32>
    %15 = arith.addf %13, %14 : vector<8x32xf32>
    %16 = vector.extract_strided_slice %15 {offsets = [0, 0], sizes = [8, 16], strides = [1, 1]} : vector<8x32xf32> to vector<8x16xf32>
    %17 = vector.extract_strided_slice %15 {offsets = [0, 16], sizes = [8, 16], strides = [1, 1]} : vector<8x32xf32> to vector<8x16xf32>
    %c0_12 = arith.constant 0 : index
    %c0_13 = arith.constant 0 : index
    %18 = vector.load %arg2[%c0_12, %c0_13] : memref<8x16xf32, #tpu.memory_space<vmem>>, vector<8x16xf32>
    %19 = math.exp %17 : vector<8x16xf32>
    %20 = arith.mulf %18, %19 : vector<8x16xf32>
    %21 = arith.addf %16, %20 : vector<8x16xf32>
    %22 = arith.truncf %21 : vector<8x16xf32> to vector<8x16xbf16>
    %c0_14 = arith.constant 0 : index
    %c0_15 = arith.constant 0 : index
    %23 = vector.load %arg5[%c0_14, %c0_15] : memref<16x512xbf16, #tpu.memory_space<vmem>>, vector<16x512xbf16>
    %cst_16 = arith.constant dense<0.000000e+00> : vector<8x512xf32>
    %24 = tpu.matmul %22, %23, %cst_16 {dimension_numbers = #tpu.dot_dimension_numbers<[1], [0], [0], [1], [0, 0, 1, 1], [], []>} : vector<8x16xbf16>, vector<16x512xbf16>, vector<8x512xf32> -> vector<8x512xf32>
    %25 = vector.broadcast %2 : vector<1x512xf32> to vector<8x512xf32>
    %26 = arith.addf %24, %25 : vector<8x512xf32>
    %cst_17 = arith.constant 0.000000e+00 : f32
    %27 = vector.broadcast %cst_17 : f32 to vector<8x512xf32>
    %28 = arith.maximumf %26, %27 : vector<8x512xf32>
    %29 = arith.truncf %28 : vector<8x512xf32> to vector<8x512xbf16>
    %c0_18 = arith.constant 0 : index
    %c0_19 = arith.constant 0 : index
    %30 = vector.load %arg6[%c0_18, %c0_19] : memref<512x32xbf16, #tpu.memory_space<vmem>>, vector<512x32xbf16>
    %cst_20 = arith.constant dense<0.000000e+00> : vector<8x32xf32>
    %31 = tpu.matmul %29, %30, %cst_20 {dimension_numbers = #tpu.dot_dimension_numbers<[1], [0], [0], [1], [0, 0, 1, 1], [], []>} : vector<8x512xbf16>, vector<512x32xbf16>, vector<8x32xf32> -> vector<8x32xf32>
    %32 = vector.broadcast %3 : vector<1x32xf32> to vector<8x32xf32>
    %33 = arith.addf %31, %32 : vector<8x32xf32>
    %34 = arith.negf %33 : vector<8x32xf32>
    %35 = math.exp %34 : vector<8x32xf32>
    %cst_21 = arith.constant 1.000000e+00 : f32
    %36 = vector.broadcast %cst_21 : f32 to vector<8x32xf32>
    %37 = arith.addf %36, %35 : vector<8x32xf32>
    %38 = arith.divf %36, %37 : vector<8x32xf32>
    %c0_22 = arith.constant 0 : index
    %c0_23 = arith.constant 0 : index
    %39 = vector.load %arg8[%c0_22, %c0_23] : memref<8x128xf32, #tpu.memory_space<vmem>>, vector<8x32xf32>
    tpu.vector_store %arg8[%c0_22, %c0_23], %38 {strides = array<i32>} : memref<8x128xf32, #tpu.memory_space<vmem>>, vector<8x32xf32>,
    %c0_24 = arith.constant 0 : index
    %c32 = arith.constant 32 : index
    %40 = vector.load %arg8[%c0_24, %c32] : memref<8x128xf32, #tpu.memory_space<vmem>>, vector<8x32xf32>
    tpu.vector_store %arg8[%c0_24, %c32], %15 {strides = array<i32>} : memref<8x128xf32, #tpu.memory_space<vmem>>, vector<8x32xf32>,
    return
  }
  func.func @transform_0(%arg0: i32) -> (i32, i32) {
    %c0_i32 = arith.constant 0 : i32
    %c0_i32_0 = arith.constant 0 : i32
    return %arg0, %c0_i32 : i32, i32
  }
  func.func @transform_1(%arg0: i32) -> (i32, i32) {
    %c0_i32 = arith.constant 0 : i32
    %c0_i32_0 = arith.constant 0 : i32
    return %arg0, %c0_i32 : i32, i32
  }
  func.func @transform_2(%arg0: i32) -> (i32, i32) {
    %c0_i32 = arith.constant 0 : i32
    %c0_i32_0 = arith.constant 0 : i32
    %c0_i32_1 = arith.constant 0 : i32
    return %c0_i32, %c0_i32_0 : i32, i32
  }
  func.func @transform_3(%arg0: i32) -> (i32, i32) {
    %c0_i32 = arith.constant 0 : i32
    %c0_i32_0 = arith.constant 0 : i32
    %c0_i32_1 = arith.constant 0 : i32
    return %c0_i32, %c0_i32_0 : i32, i32
  }
  func.func @transform_4(%arg0: i32) -> (i32, i32) {
    %c0_i32 = arith.constant 0 : i32
    %c0_i32_0 = arith.constant 0 : i32
    %c0_i32_1 = arith.constant 0 : i32
    return %c0_i32, %c0_i32_0 : i32, i32
  }
  func.func @transform_5(%arg0: i32) -> (i32, i32) {
    %c0_i32 = arith.constant 0 : i32
    %c0_i32_0 = arith.constant 0 : i32
    %c0_i32_1 = arith.constant 0 : i32
    return %c0_i32, %c0_i32_0 : i32, i32
  }
  func.func @transform_6(%arg0: i32) -> (i32, i32) {
    %c0_i32 = arith.constant 0 : i32
    %c0_i32_0 = arith.constant 0 : i32
    %c0_i32_1 = arith.constant 0 : i32
    return %c0_i32, %c0_i32_0 : i32, i32
  }
  func.func @transform_7(%arg0: i32) -> (i32, i32) {
    %c0_i32 = arith.constant 0 : i32
    %c0_i32_0 = arith.constant 0 : i32
    return %arg0, %c0_i32 : i32, i32
  }
}

</mosaic_0001>

<llo_original>
// kernel: tpu_custom_call.1
$region0: #{tpu_custom_call.1}
  #allocation0 [shape = 'u32[]', space=smem, size = 0x4, offset = 0x4, fixed_abs, tag = 'smem constant byte address 0x4 - core index']
  #allocation1 [shape = 'u32[144,128]{1,0:T(1,128)}', space=vmem, size = 0x12000, scoped, tag = 'internal scratch']
  %s0 = inlined_call_operand.vmem [shape: f32[8,32], index: 0, kind: input, shape index: {}]
  %s1 = inlined_call_operand.vmem [shape: f32[8,16], index: 1, kind: input, shape index: {}]
  %s2 = inlined_call_operand.vmem [shape: bf16[32,512], index: 2, kind: input, shape index: {}]
  %s3 = inlined_call_operand.vmem [shape: f32[512,32], index: 3, kind: input, shape index: {}]
  %s4 = inlined_call_operand.vmem [shape: bf16[16,512], index: 4, kind: input, shape index: {}]
  %s5 = inlined_call_operand.vmem [shape: bf16[512,32], index: 5, kind: input, shape index: {}]
  %s6 = inlined_call_operand.vmem [shape: f32[4,512], index: 6, kind: input, shape index: {}]
  %s7 = inlined_call_operand.hbm [shape: f32[8,128], index: 7, kind: output, shape index: {}]
  %s8 = sld [smem:[#allocation0]]
  $region38: #{tpu_custom_call.1} parent=0
    _
  %s10 = ssub.s32 1, %s8
  %s11 = scalar_select 0, %s10, %s8
  $region1: #{tpu_custom_call.1} parent=0
    #allocation2 [shape = 'u8[4096]{0}', space=vmem, size = 0x1000, scoped, tag = 'output window, operand 0, single buffered']
    #allocation3 [shape = 's32[1]{0}', space=sflag, size = 0x4, scoped, tag = 'scoped memory for tpu_custom_call.1']
    %12 = vsyncpa [#allocation3], 0
    // Predicated region
    $region2: #{tpu_custom_call.1} parent=1 // pred_check
      _
    $region3: #{tpu_custom_call.1} parent=1 // pred_check_branch
      %14 = sbr.rel (0) target = $region5
    $region4: #{tpu_custom_call.1} parent=1 // pred_region
      _
    $region5: #{tpu_custom_call.1} parent=1 // pred_fallthru
      _
    // Predicated region
    $region6: #{tpu_custom_call.1} parent=1 // pred_check
      _
    $region7: #{tpu_custom_call.1} parent=1 // pred_check_branch
      %16 = sbr.rel (0) target = $region9
    $region8: #{tpu_custom_call.1} parent=1 // pred_region
      _
    $region9: #{tpu_custom_call.1} parent=1 // pred_fallthru
      _
    // Predicated region
    $region10: #{tpu_custom_call.1} parent=1 // pred_check
      _
    $region11: #{tpu_custom_call.1} parent=1 // pred_check_branch
      %18 = sbr.rel (0) target = $region13
    $region12: #{tpu_custom_call.1} parent=1 // pred_region
      _
    $region13: #{tpu_custom_call.1} parent=1 // pred_fallthru
      _
    // Predicated region
    $region14: #{tpu_custom_call.1} parent=1 // pred_check
      _
    $region15: #{tpu_custom_call.1} parent=1 // pred_check_branch
      %20 = sbr.rel (0) target = $region17
    $region16: #{tpu_custom_call.1} parent=1 // pred_region
      _
    $region17: #{tpu_custom_call.1} parent=1 // pred_fallthru
      _
    // Predicated region
    $region18: #{tpu_custom_call.1} parent=1 // pred_check
      _
    $region19: #{tpu_custom_call.1} parent=1 // pred_check_branch
      %22 = sbr.rel (0) target = $region21
    $region20: #{tpu_custom_call.1} parent=1 // pred_region
      _
    $region21: #{tpu_custom_call.1} parent=1 // pred_fallthru
      _
    // Predicated region
    $region22: #{tpu_custom_call.1} parent=1 // pred_check
      _
    $region23: #{tpu_custom_call.1} parent=1 // pred_check_branch
      %24 = sbr.rel (0) target = $region25
    $region24: #{tpu_custom_call.1} parent=1 // pred_region
      _
    $region25: #{tpu_custom_call.1} parent=1 // pred_fallthru
      _
    // Predicated region
    $region26: #{tpu_custom_call.1} parent=1 // pred_check
      _
    $region27: #{tpu_custom_call.1} parent=1 // pred_check_branch
      %26 = sbr.rel (0) target = $region29
    $region28: #{tpu_custom_call.1} parent=1 // pred_region
      _
    $region29: #{tpu_custom_call.1} parent=1 // pred_fallthru
      _
    %v28 = vld [vmem:[%s6] ss:$4 sm:$0xf]
    %v29 = vld [vmem:[%s6 + $0x1] sm:$0x1]
    %s30 = scalar_lea.vmem %s6, 2
    %v31 = vld [vmem:[%s30] ss:$4 sm:$0xf]
    %v32 = vld [vmem:[%s6 + $0x3] sm:$0x1]
    %v33 = vld [vmem:[%s0] sm:$0xff]
    %v34 = vpack.c.bf16 %v33, %v33
    %v35 = vld [vmem:[%s2] sm:$0xff]
    %v36 = vld [vmem:[%s2 + $0x8] sm:$0xff]
    %v37 = vld [vmem:[%s2 + $0x10] sm:$0xff]
    %v38 = vld [vmem:[%s2 + $0x18] sm:$0xff]
    %v39 = vld [vmem:[%s2 + $0x20] sm:$0xff]
    %v40 = vld [vmem:[%s2 + $0x28] sm:$0xff]
    %v41 = vld [vmem:[%s2 + $0x30] sm:$0xff]
    %v42 = vld [vmem:[%s2 + $0x38] sm:$0xff]
    %v44 = vlaneseq
    %v45 = vshrl.u32 %v44, 7
    %v46 = vsub.s32 0, %v45
    %v47 = vrot.slane %v28, %v46
    %v48 = vlaneseq
    %v49 = vshrl.u32 %v48, 7
    %v50 = vsub.s32 1, %v49
    %v51 = vrot.slane %v28, %v50
    %v52 = vlaneseq
    %v53 = vshrl.u32 %v52, 7
    %v54 = vsub.s32 2, %v53
    %v55 = vrot.slane %v28, %v54
    %v56 = vlaneseq
    %v57 = vshrl.u32 %v56, 7
    %v58 = vsub.s32 3, %v57
    %v59 = vrot.slane %v28, %v58
    %v72 = vunpack.c.l.b16 %v35
    %v73 = vunpack.c.h.b16 %v35
    %v74 = vunpack.c.l.b16 %v36
    %v75 = vunpack.c.h.b16 %v36
    %v76 = vunpack.c.l.b16 %v37
    %v77 = vunpack.c.h.b16 %v37
    %v78 = vunpack.c.l.b16 %v38
    %v79 = vunpack.c.h.b16 %v38
    %v80 = vunpack.c.l.b16 %v39
    %v81 = vunpack.c.h.b16 %v39
    %v82 = vunpack.c.l.b16 %v40
    %v83 = vunpack.c.h.b16 %v40
    %v84 = vunpack.c.l.b16 %v41
    %v85 = vunpack.c.h.b16 %v41
    %v86 = vunpack.c.l.b16 %v42
    %v87 = vunpack.c.h.b16 %v42
    %v88 = vpack.c.b16 %v76, %v72
    %v89 = vpack.c.b16 %v77, %v73
    %v90 = vpack.c.b16 %v78, %v74
    %v91 = vpack.c.b16 %v79, %v75
    %v92 = vpack.c.b16 %v84, %v80
    %v93 = vpack.c.b16 %v85, %v81
    %v94 = vpack.c.b16 %v86, %v82
    %v95 = vpack.c.b16 %v87, %v83
    %vm104 = vcmask 261120
    %v106 = vsel %vm104, %v34, 0
    %108 = vmatprep.subr.bf16.mxu0 0
    %109 = vmatpush1.bf16.msra.mxu0 0
    %110 = vmatprep.subr.bf16.mxu0 0
    %111 = vmatpush1.bf16.msra.mxu0 0
    %112 = vmatprep.subr.bf16.mxu0 0
    %113 = vmatpush1.bf16.msra.mxu0 0
    %114 = vmatprep.subr.bf16.mxu0 0
    %115 = vmatpush1.bf16.msra.mxu0 0
    %116 = vmatprep.subr.bf16.mxu0 0
    %117 = vmatpush1.bf16.msra.mxu0 0
    %118 = vmatprep.subr.bf16.mxu0 0
    %119 = vmatpush1.bf16.msra.mxu0 0
    %120 = vmatprep.subr.bf16.mxu0 %v93
    %121 = vmatpush1.bf16.msra.mxu0 %v92
    %122 = vmatprep.subr.bf16.mxu0 %v89
    %123 = vmatpush1.bf16.msra.mxu0 %v88
    %124 = vmatprep.subr.bf16.mxu0 0
    %125 = vmatpush2.bf16.msra.mxu0 0
    %126 = vmatprep.subr.bf16.mxu0 0
    %127 = vmatpush2.bf16.msra.mxu0 0
    %128 = vmatprep.subr.bf16.mxu0 0
    %129 = vmatpush2.bf16.msra.mxu0 0
    %130 = vmatprep.subr.bf16.mxu0 0
    %131 = vmatpush2.bf16.msra.mxu0 0
    %132 = vmatprep.subr.bf16.mxu0 0
    %133 = vmatpush2.bf16.msra.mxu0 0
    %134 = vmatprep.subr.bf16.mxu0 0
    %135 = vmatpush2.bf16.msra.mxu0 0
    %136 = vmatprep.subr.bf16.mxu0 0
    %137 = vmatpush2.bf16.msra.mxu0 0
    %138 = vmatprep.subr.bf16.mxu0 0
    %139 = vmatpush2.bf16.msra.mxu0 0
    %140 = vmatprep.mubr.bf16.mxu0 0
    %141 = vmatmul.mubr.bf16.gmra.mxu0 %v106
    %v142 = vpop.f32.mrf.mxu0
    %v143 = vadd.f32 %v47, %v142
    %v144 = vpop.f32.mrf.mxu0
    %v145 = vadd.f32 %v51, %v144
    %v146 = vpop.f32.mrf.mxu0
    %v147 = vpop.f32.mrf.mxu0
    %148 = vdwg.mxu0
    %149 = vmatprep.subr.bf16.mxu0 0
    %150 = vmatpush1.bf16.msra.mxu0 0
    %151 = vmatprep.subr.bf16.mxu0 0
    %152 = vmatpush1.bf16.msra.mxu0 0
    %153 = vmatprep.subr.bf16.mxu0 0
    %154 = vmatpush1.bf16.msra.mxu0 0
    %155 = vmatprep.subr.bf16.mxu0 0
    %156 = vmatpush1.bf16.msra.mxu0 0
    %157 = vmatprep.subr.bf16.mxu0 0
    %158 = vmatpush1.bf16.msra.mxu0 0
    %159 = vmatprep.subr.bf16.mxu0 0
    %160 = vmatpush1.bf16.msra.mxu0 0
    %161 = vmatprep.subr.bf16.mxu0 %v95
    %162 = vmatpush1.bf16.msra.mxu0 %v94
    %163 = vmatprep.subr.bf16.mxu0 %v91
    %164 = vmatpush1.bf16.msra.mxu0 %v90
    %165 = vmatprep.subr.bf16.mxu0 0
    %166 = vmatpush2.bf16.msra.mxu0 0
    %167 = vmatprep.subr.bf16.mxu0 0
    %168 = vmatpush2.bf16.msra.mxu0 0
    %169 = vmatprep.subr.bf16.mxu0 0
    %170 = vmatpush2.bf16.msra.mxu0 0
    %171 = vmatprep.subr.bf16.mxu0 0
    %172 = vmatpush2.bf16.msra.mxu0 0
    %173 = vmatprep.subr.bf16.mxu0 0
    %174 = vmatpush2.bf16.msra.mxu0 0
    %175 = vmatprep.subr.bf16.mxu0 0
    %176 = vmatpush2.bf16.msra.mxu0 0
    %177 = vmatprep.subr.bf16.mxu0 0
    %178 = vmatpush2.bf16.msra.mxu0 0
    %179 = vmatprep.subr.bf16.mxu0 0
    %180 = vmatpush2.bf16.msra.mxu0 0
    %181 = vmatprep.mubr.bf16.mxu0 0
    %182 = vmatmul.mubr.bf16.gmra.mxu0 %v106
    %v183 = vpop.f32.mrf.mxu0
    %v184 = vadd.f32 %v55, %v183
    %v185 = vpop.f32.mrf.mxu0
    %v186 = vadd.f32 %v59, %v185
    %v187 = vpop.f32.mrf.mxu0
    %v188 = vpop.f32.mrf.mxu0
    %189 = vdwg.mxu0
    %v190 = vmax.f32 %v143, 0.0
    %v191 = vmax.f32 %v145, 0.0
    %v192 = vmax.f32 %v184, 0.0
    %v193 = vmax.f32 %v186, 0.0
    %v194 = vld [vmem:[%s3] sm:$0xff]
    %v195 = vld [vmem:[%s3 + $0x8] sm:$0xff]
    %v196 = vld [vmem:[%s3 + $0x10] sm:$0xff]
    %v197 = vld [vmem:[%s3 + $0x18] sm:$0xff]
    %v198 = vld [vmem:[%s3 + $0x20] sm:$0xff]
    %v199 = vld [vmem:[%s3 + $0x28] sm:$0xff]
    %v200 = vld [vmem:[%s3 + $0x30] sm:$0xff]
    %v201 = vld [vmem:[%s3 + $0x38] sm:$0xff]
    %v202 = vld [vmem:[%s3 + $0x40] sm:$0xff]
    %v203 = vld [vmem:[%s3 + $0x48] sm:$0xff]
    %v204 = vld [vmem:[%s3 + $0x50] sm:$0xff]
    %v205 = vld [vmem:[%s3 + $0x58] sm:$0xff]
    %v206 = vld [vmem:[%s3 + $0x60] sm:$0xff]
    %v207 = vld [vmem:[%s3 + $0x68] sm:$0xff]
    %v208 = vld [vmem:[%s3 + $0x70] sm:$0xff]
    %v209 = vld [vmem:[%s3 + $0x78] sm:$0xff]
    %v210 = vld [vmem:[%s3 + $0x80] sm:$0xff]
    %v211 = vld [vmem:[%s3 + $0x88] sm:$0xff]
    %v212 = vld [vmem:[%s3 + $0x90] sm:$0xff]
    %v213 = vld [vmem:[%s3 + $0x98] sm:$0xff]
    %v214 = vld [vmem:[%s3 + $0xa0] sm:$0xff]
    %v215 = vld [vmem:[%s3 + $0xa8] sm:$0xff]
    %v216 = vld [vmem:[%s3 + $0xb0] sm:$0xff]
    %v217 = vld [vmem:[%s3 + $0xb8] sm:$0xff]
    %v218 = vld [vmem:[%s3 + $0xc0] sm:$0xff]
    %v219 = vld [vmem:[%s3 + $0xc8] sm:$0xff]
    %v220 = vld [vmem:[%s3 + $0xd0] sm:$0xff]
    %v221 = vld [vmem:[%s3 + $0xd8] sm:$0xff]
    %v222 = vld [vmem:[%s3 + $0xe0] sm:$0xff]
    %v223 = vld [vmem:[%s3 + $0xe8] sm:$0xff]
    %v224 = vld [vmem:[%s3 + $0xf0] sm:$0xff]
    %v225 = vld [vmem:[%s3 + $0xf8] sm:$0xff]
    %v226 = vld [vmem:[%s3 + $0x100] sm:$0xff]
    %v227 = vld [vmem:[%s3 + $0x108] sm:$0xff]
    %v228 = vld [vmem:[%s3 + $0x110] sm:$0xff]
    %v229 = vld [vmem:[%s3 + $0x118] sm:$0xff]
    %v230 = vld [vmem:[%s3 + $0x120] sm:$0xff]
    %v231 = vld [vmem:[%s3 + $0x128] sm:$0xff]
    %v232 = vld [vmem:[%s3 + $0x130] sm:$0xff]
    %v233 = vld [vmem:[%s3 + $0x138] sm:$0xff]
    %v234 = vld [vmem:[%s3 + $0x140] sm:$0xff]
    %v235 = vld [vmem:[%s3 + $0x148] sm:$0xff]
    %v236 = vld [vmem:[%s3 + $0x150] sm:$0xff]
    %v237 = vld [vmem:[%s3 + $0x158] sm:$0xff]
    %v238 = vld [vmem:[%s3 + $0x160] sm:$0xff]
    %v239 = vld [vmem:[%s3 + $0x168] sm:$0xff]
    %v240 = vld [vmem:[%s3 + $0x170] sm:$0xff]
    %v241 = vld [vmem:[%s3 + $0x178] sm:$0xff]
    %v242 = vld [vmem:[%s3 + $0x180] sm:$0xff]
    %v243 = vld [vmem:[%s3 + $0x188] sm:$0xff]
    %v244 = vld [vmem:[%s3 + $0x190] sm:$0xff]
    %v245 = vld [vmem:[%s3 + $0x198] sm:$0xff]
    %v246 = vld [vmem:[%s3 + $0x1a0] sm:$0xff]
    %v247 = vld [vmem:[%s3 + $0x1a8] sm:$0xff]
    %v248 = vld [vmem:[%s3 + $0x1b0] sm:$0xff]
    %v249 = vld [vmem:[%s3 + $0x1b8] sm:$0xff]
    %v250 = vld [vmem:[%s3 + $0x1c0] sm:$0xff]
    %v251 = vld [vmem:[%s3 + $0x1c8] sm:$0xff]
    %v252 = vld [vmem:[%s3 + $0x1d0] sm:$0xff]
    %v253 = vld [vmem:[%s3 + $0x1d8] sm:$0xff]
    %v254 = vld [vmem:[%s3 + $0x1e0] sm:$0xff]
    %v255 = vld [vmem:[%s3 + $0x1e8] sm:$0xff]
    %v256 = vld [vmem:[%s3 + $0x1f0] sm:$0xff]
    %v257 = vld [vmem:[%s3 + $0x1f8] sm:$0xff]
    %v258 = vlaneseq
    %v259 = vshrl.u32 %v258, 7
    %v260 = vsub.s32 0, %v259
    %v261 = vrot.slane %v29, %v260
    %262 = vmatprep.subr.mxu0 0.0
    %263 = vmatpush1.msra.mxu0 %v209
    %264 = vmatprep.subr.mxu0 0.0
    %265 = vmatpush1.msra.mxu0 %v208
    %266 = vmatprep.subr.mxu0 0.0
    %267 = vmatpush1.msra.mxu0 %v207
    %268 = vmatprep.subr.mxu0 0.0
    %269 = vmatpush1.msra.mxu0 %v206
    %270 = vmatprep.subr.mxu0 0.0
    %271 = vmatpush1.msra.mxu0 %v205
    %272 = vmatprep.subr.mxu0 0.0
    %273 = vmatpush1.msra.mxu0 %v204
    %274 = vmatprep.subr.mxu0 0.0
    %275 = vmatpush1.msra.mxu0 %v203
    %276 = vmatprep.subr.mxu0 0.0
    %277 = vmatpush1.msra.mxu0 %v202
    %278 = vmatprep.subr.mxu0 0.0
    %279 = vmatpush1.msra.mxu0 %v201
    %280 = vmatprep.subr.mxu0 0.0
    %281 = vmatpush1.msra.mxu0 %v200
    %282 = vmatprep.subr.mxu0 0.0
    %283 = vmatpush1.msra.mxu0 %v199
    %284 = vmatprep.subr.mxu0 0.0
    %285 = vmatpush1.msra.mxu0 %v198
    %286 = vmatprep.subr.mxu0 0.0
    %287 = vmatpush1.msra.mxu0 %v197
    %288 = vmatprep.subr.mxu0 0.0
    %289 = vmatpush1.msra.mxu0 %v196
    %290 = vmatprep.subr.mxu0 0.0
    %291 = vmatpush1.msra.mxu0 %v195
    %292 = vmatprep.subr.mxu0 0.0
    %293 = vmatpush1.msra.mxu0 %v194
    %294 = vmatprep.subr.mxu0 0.0
    %295 = vmatpush2.msra.mxu0 %v225
    %296 = vmatprep.subr.mxu0 0.0
    %297 = vmatpush2.msra.mxu0 %v224
    %298 = vmatprep.subr.mxu0 0.0
    %299 = vmatpush2.msra.mxu0 %v223
    %300 = vmatprep.subr.mxu0 0.0
    %301 = vmatpush2.msra.mxu0 %v222
    %302 = vmatprep.subr.mxu0 0.0
    %303 = vmatpush2.msra.mxu0 %v221
    %304 = vmatprep.subr.mxu0 0.0
    %305 = vmatpush2.msra.mxu0 %v220
    %306 = vmatprep.subr.mxu0 0.0
    %307 = vmatpush2.msra.mxu0 %v219
    %308 = vmatprep.subr.mxu0 0.0
    %309 = vmatpush2.msra.mxu0 %v218
    %310 = vmatprep.subr.mxu0 0.0
    %311 = vmatpush2.msra.mxu0 %v217
    %312 = vmatprep.subr.mxu0 0.0
    %313 = vmatpush2.msra.mxu0 %v216
    %314 = vmatprep.subr.mxu0 0.0
    %315 = vmatpush2.msra.mxu0 %v215
    %316 = vmatprep.subr.mxu0 0.0
    %317 = vmatpush2.msra.mxu0 %v214
    %318 = vmatprep.subr.mxu0 0.0
    %319 = vmatpush2.msra.mxu0 %v213
    %320 = vmatprep.subr.mxu0 0.0
    %321 = vmatpush2.msra.mxu0 %v212
    %322 = vmatprep.subr.mxu0 0.0
    %323 = vmatpush2.msra.mxu0 %v211
    %324 = vmatprep.subr.mxu0 0.0
    %325 = vmatpush2.msra.mxu0 %v210
    %326 = vmatprep.mubr.f32.mxu0 %v191
    %327 = vmatmul.mubr.f32.gmra.mxu0 %v190
    %v328 = vpop.f32.mrf.mxu0
    %v329 = vadd.f32 %v261, %v328
    %v330 = vpop.f32.mrf.mxu0
    %331 = vdwg.mxu0
    %332 = vmatprep.subr.mxu0 0.0
    %333 = vmatpush1.msra.mxu0 %v241
    %334 = vmatprep.subr.mxu0 0.0
    %335 = vmatpush1.msra.mxu0 %v240
    %336 = vmatprep.subr.mxu0 0.0
    %337 = vmatpush1.msra.mxu0 %v239
    %338 = vmatprep.subr.mxu0 0.0
    %339 = vmatpush1.msra.mxu0 %v238
    %340 = vmatprep.subr.mxu0 0.0
    %341 = vmatpush1.msra.mxu0 %v237
    %342 = vmatprep.subr.mxu0 0.0
    %343 = vmatpush1.msra.mxu0 %v236
    %344 = vmatprep.subr.mxu0 0.0
    %345 = vmatpush1.msra.mxu0 %v235
    %346 = vmatprep.subr.mxu0 0.0
    %347 = vmatpush1.msra.mxu0 %v234
    %348 = vmatprep.subr.mxu0 0.0
    %349 = vmatpush1.msra.mxu0 %v233
    %350 = vmatprep.subr.mxu0 0.0
    %351 = vmatpush1.msra.mxu0 %v232
    %352 = vmatprep.subr.mxu0 0.0
    %353 = vmatpush1.msra.mxu0 %v231
    %354 = vmatprep.subr.mxu0 0.0
    %355 = vmatpush1.msra.mxu0 %v230
    %356 = vmatprep.subr.mxu0 0.0
    %357 = vmatpush1.msra.mxu0 %v229
    %358 = vmatprep.subr.mxu0 0.0
    %359 = vmatpush1.msra.mxu0 %v228
    %360 = vmatprep.subr.mxu0 0.0
    %361 = vmatpush1.msra.mxu0 %v227
    %362 = vmatprep.subr.mxu0 0.0
    %363 = vmatpush1.msra.mxu0 %v226
    %364 = vmatprep.subr.mxu0 0.0
    %365 = vmatpush2.msra.mxu0 %v257
    %366 = vmatprep.subr.mxu0 0.0
    %367 = vmatpush2.msra.mxu0 %v256
    %368 = vmatprep.subr.mxu0 0.0
    %369 = vmatpush2.msra.mxu0 %v255
    %370 = vmatprep.subr.mxu0 0.0
    %371 = vmatpush2.msra.mxu0 %v254
    %372 = vmatprep.subr.mxu0 0.0
    %373 = vmatpush2.msra.mxu0 %v253
    %374 = vmatprep.subr.mxu0 0.0
    %375 = vmatpush2.msra.mxu0 %v252
    %376 = vmatprep.subr.mxu0 0.0
    %377 = vmatpush2.msra.mxu0 %v251
    %378 = vmatprep.subr.mxu0 0.0
    %379 = vmatpush2.msra.mxu0 %v250
    %380 = vmatprep.subr.mxu0 0.0
    %381 = vmatpush2.msra.mxu0 %v249
    %382 = vmatprep.subr.mxu0 0.0
    %383 = vmatpush2.msra.mxu0 %v248
    %384 = vmatprep.subr.mxu0 0.0
    %385 = vmatpush2.msra.mxu0 %v247
    %386 = vmatprep.subr.mxu0 0.0
    %387 = vmatpush2.msra.mxu0 %v246
    %388 = vmatprep.subr.mxu0 0.0
    %389 = vmatpush2.msra.mxu0 %v245
    %390 = vmatprep.subr.mxu0 0.0
    %391 = vmatpush2.msra.mxu0 %v244
    %392 = vmatprep.subr.mxu0 0.0
    %393 = vmatpush2.msra.mxu0 %v243
    %394 = vmatprep.subr.mxu0 0.0
    %395 = vmatpush2.msra.mxu0 %v242
    %396 = vmatprep.mubr.f32.mxu0 %v193
    %397 = vmatmul.mubr.f32.gmra.mxu0 %v192
    %v398 = vpop.f32.mrf.mxu0
    %v399 = vadd.f32 %v329, %v398
    %v400 = vpop.f32.mrf.mxu0
    %401 = vdwg.mxu0
    %v402 = vld [vmem:[%s1] sm:$0xff]
    %v403 = vmul.f32 %v399, 1.442695
    %v404 = vpow.pop %v403
    %406 = vrot.lane.b32.xlu0 %v404, 112
    %v407 = vpop.permute.xlu0 %406
    %v409 = vmul.f32 %v402, %v407
    %v410 = vadd.f32 %v399, %v409
    %v411 = vpack.c.bf16 %v410, %v410
    %v412 = vld [vmem:[%s4] sm:$0xff]
    %v413 = vld [vmem:[%s4 + $0x8] sm:$0xff]
    %v414 = vld [vmem:[%s4 + $0x10] sm:$0xff]
    %v415 = vld [vmem:[%s4 + $0x18] sm:$0xff]
    %v417 = vlaneseq
    %v418 = vshrl.u32 %v417, 7
    %v419 = vsub.s32 0, %v418
    %v420 = vrot.slane %v31, %v419
    %v421 = vlaneseq
    %v422 = vshrl.u32 %v421, 7
    %v423 = vsub.s32 1, %v422
    %v424 = vrot.slane %v31, %v423
    %v425 = vlaneseq
    %v426 = vshrl.u32 %v425, 7
    %v427 = vsub.s32 2, %v426
    %v428 = vrot.slane %v31, %v427
    %v429 = vlaneseq
    %v430 = vshrl.u32 %v429, 7
    %v431 = vsub.s32 3, %v430
    %v432 = vrot.slane %v31, %v431
    %v441 = vunpack.c.l.b16 %v412
    %v442 = vunpack.c.h.b16 %v412
    %v443 = vunpack.c.l.b16 %v413
    %v444 = vunpack.c.h.b16 %v413
    %v445 = vunpack.c.l.b16 %v414
    %v446 = vunpack.c.h.b16 %v414
    %v447 = vunpack.c.l.b16 %v415
    %v448 = vunpack.c.h.b16 %v415
    %v449 = vpack.c.b16 %v445, %v441
    %v450 = vpack.c.b16 %v446, %v442
    %v451 = vpack.c.b16 %v447, %v443
    %v452 = vpack.c.b16 %v448, %v444
    %vm457 = vcmask 130048
    %v459 = vsel %vm457, %v411, 0
    %461 = vmatprep.subr.bf16.mxu0 0
    %462 = vmatpush1.bf16.msra.mxu0 0
    %463 = vmatprep.subr.bf16.mxu0 0
    %464 = vmatpush1.bf16.msra.mxu0 0
    %465 = vmatprep.subr.bf16.mxu0 0
    %466 = vmatpush1.bf16.msra.mxu0 0
    %467 = vmatprep.subr.bf16.mxu0 0
    %468 = vmatpush1.bf16.msra.mxu0 0
    %469 = vmatprep.subr.bf16.mxu0 0
    %470 = vmatpush1.bf16.msra.mxu0 0
    %471 = vmatprep.subr.bf16.mxu0 0
    %472 = vmatpush1.bf16.msra.mxu0 0
    %473 = vmatprep.subr.bf16.mxu0 0
    %474 = vmatpush1.bf16.msra.mxu0 0
    %475 = vmatprep.subr.bf16.mxu0 %v450
    %476 = vmatpush1.bf16.msra.mxu0 %v449
    %477 = vmatprep.subr.bf16.mxu0 0
    %478 = vmatpush2.bf16.msra.mxu0 0
    %479 = vmatprep.subr.bf16.mxu0 0
    %480 = vmatpush2.bf16.msra.mxu0 0
    %481 = vmatprep.subr.bf16.mxu0 0
    %482 = vmatpush2.bf16.msra.mxu0 0
    %483 = vmatprep.subr.bf16.mxu0 0
    %484 = vmatpush2.bf16.msra.mxu0 0
    %485 = vmatprep.subr.bf16.mxu0 0
    %486 = vmatpush2.bf16.msra.mxu0 0
    %487 = vmatprep.subr.bf16.mxu0 0
    %488 = vmatpush2.bf16.msra.mxu0 0
    %489 = vmatprep.subr.bf16.mxu0 0
    %490 = vmatpush2.bf16.msra.mxu0 0
    %491 = vmatprep.subr.bf16.mxu0 0
    %492 = vmatpush2.bf16.msra.mxu0 0
    %493 = vmatprep.mubr.bf16.mxu0 0
    %494 = vmatmul.mubr.bf16.gmra.mxu0 %v459
    %v495 = vpop.f32.mrf.mxu0
    %v496 = vadd.f32 %v420, %v495
    %v497 = vpop.f32.mrf.mxu0
    %v498 = vadd.f32 %v424, %v497
    %v499 = vpop.f32.mrf.mxu0
    %v500 = vpop.f32.mrf.mxu0
    %501 = vdwg.mxu0
    %502 = vmatprep.subr.bf16.mxu0 0
    %503 = vmatpush1.bf16.msra.mxu0 0
    %504 = vmatprep.subr.bf16.mxu0 0
    %505 = vmatpush1.bf16.msra.mxu0 0
    %506 = vmatprep.subr.bf16.mxu0 0
    %507 = vmatpush1.bf16.msra.mxu0 0
    %508 = vmatprep.subr.bf16.mxu0 0
    %509 = vmatpush1.bf16.msra.mxu0 0
    %510 = vmatprep.subr.bf16.mxu0 0
    %511 = vmatpush1.bf16.msra.mxu0 0
    %512 = vmatprep.subr.bf16.mxu0 0
    %513 = vmatpush1.bf16.msra.mxu0 0
    %514 = vmatprep.subr.bf16.mxu0 0
    %515 = vmatpush1.bf16.msra.mxu0 0
    %516 = vmatprep.subr.bf16.mxu0 %v452
    %517 = vmatpush1.bf16.msra.mxu0 %v451
    %518 = vmatprep.subr.bf16.mxu0 0
    %519 = vmatpush2.bf16.msra.mxu0 0
    %520 = vmatprep.subr.bf16.mxu0 0
    %521 = vmatpush2.bf16.msra.mxu0 0
    %522 = vmatprep.subr.bf16.mxu0 0
    %523 = vmatpush2.bf16.msra.mxu0 0
    %524 = vmatprep.subr.bf16.mxu0 0
    %525 = vmatpush2.bf16.msra.mxu0 0
    %526 = vmatprep.subr.bf16.mxu0 0
    %527 = vmatpush2.bf16.msra.mxu0 0
    %528 = vmatprep.subr.bf16.mxu0 0
    %529 = vmatpush2.bf16.msra.mxu0 0
    %530 = vmatprep.subr.bf16.mxu0 0
    %531 = vmatpush2.bf16.msra.mxu0 0
    %532 = vmatprep.subr.bf16.mxu0 0
    %533 = vmatpush2.bf16.msra.mxu0 0
    %534 = vmatprep.mubr.bf16.mxu0 0
    %535 = vmatmul.mubr.bf16.gmra.mxu0 %v459
    %v536 = vpop.f32.mrf.mxu0
    %v537 = vadd.f32 %v428, %v536
    %v538 = vpop.f32.mrf.mxu0
    %v539 = vadd.f32 %v432, %v538
    %v540 = vpop.f32.mrf.mxu0
    %v541 = vpop.f32.mrf.mxu0
    %542 = vdwg.mxu0
    %v543 = vmax.f32 %v496, 0.0
    %v544 = vmax.f32 %v498, 0.0
    %v545 = vmax.f32 %v537, 0.0
    %v546 = vmax.f32 %v539, 0.0
    %v547 = vpack.c.bf16 %v543, %v543
    %v548 = vpack.c.bf16 %v544, %v544
    %v549 = vpack.c.bf16 %v545, %v545
    %v550 = vpack.c.bf16 %v546, %v546
    %v551 = vld [vmem:[%s5] sm:$0xf]
    %v552 = vld [vmem:[%s5 + $0x4] sm:$0xf]
    %v553 = vld [vmem:[%s5 + $0x8] sm:$0xf]
    %v554 = vld [vmem:[%s5 + $0xc] sm:$0xf]
    %v555 = vld [vmem:[%s5 + $0x10] sm:$0xf]
    %v556 = vld [vmem:[%s5 + $0x14] sm:$0xf]
    %v557 = vld [vmem:[%s5 + $0x18] sm:$0xf]
    %v558 = vld [vmem:[%s5 + $0x1c] sm:$0xf]
    %v559 = vld [vmem:[%s5 + $0x20] sm:$0xf]
    %v560 = vld [vmem:[%s5 + $0x24] sm:$0xf]
    %v561 = vld [vmem:[%s5 + $0x28] sm:$0xf]
    %v562 = vld [vmem:[%s5 + $0x2c] sm:$0xf]
    %v563 = vld [vmem:[%s5 + $0x30] sm:$0xf]
    %v564 = vld [vmem:[%s5 + $0x34] sm:$0xf]
    %v565 = vld [vmem:[%s5 + $0x38] sm:$0xf]
    %v566 = vld [vmem:[%s5 + $0x3c] sm:$0xf]
    %v567 = vld [vmem:[%s5 + $0x40] sm:$0xf]
    %v568 = vld [vmem:[%s5 + $0x44] sm:$0xf]
    %v569 = vld [vmem:[%s5 + $0x48] sm:$0xf]
    %v570 = vld [vmem:[%s5 + $0x4c] sm:$0xf]
    %v571 = vld [vmem:[%s5 + $0x50] sm:$0xf]
    %v572 = vld [vmem:[%s5 + $0x54] sm:$0xf]
    %v573 = vld [vmem:[%s5 + $0x58] sm:$0xf]
    %v574 = vld [vmem:[%s5 + $0x5c] sm:$0xf]
    %v575 = vld [vmem:[%s5 + $0x60] sm:$0xf]
    %v576 = vld [vmem:[%s5 + $0x64] sm:$0xf]
    %v577 = vld [vmem:[%s5 + $0x68] sm:$0xf]
    %v578 = vld [vmem:[%s5 + $0x6c] sm:$0xf]
    %v579 = vld [vmem:[%s5 + $0x70] sm:$0xf]
    %v580 = vld [vmem:[%s5 + $0x74] sm:$0xf]
    %v581 = vld [vmem:[%s5 + $0x78] sm:$0xf]
    %v582 = vld [vmem:[%s5 + $0x7c] sm:$0xf]
    %v583 = vld [vmem:[%s5 + $0x80] sm:$0xf]
    %v584 = vld [vmem:[%s5 + $0x84] sm:$0xf]
    %v585 = vld [vmem:[%s5 + $0x88] sm:$0xf]
    %v586 = vld [vmem:[%s5 + $0x8c] sm:$0xf]
    %v587 = vld [vmem:[%s5 + $0x90] sm:$0xf]
    %v588 = vld [vmem:[%s5 + $0x94] sm:$0xf]
    %v589 = vld [vmem:[%s5 + $0x98] sm:$0xf]
    %v590 = vld [vmem:[%s5 + $0x9c] sm:$0xf]
    %v591 = vld [vmem:[%s5 + $0xa0] sm:$0xf]
    %v592 = vld [vmem:[%s5 + $0xa4] sm:$0xf]
    %v593 = vld [vmem:[%s5 + $0xa8] sm:$0xf]
    %v594 = vld [vmem:[%s5 + $0xac] sm:$0xf]
    %v595 = vld [vmem:[%s5 + $0xb0] sm:$0xf]
    %v596 = vld [vmem:[%s5 + $0xb4] sm:$0xf]
    %v597 = vld [vmem:[%s5 + $0xb8] sm:$0xf]
    %v598 = vld [vmem:[%s5 + $0xbc] sm:$0xf]
    %v599 = vld [vmem:[%s5 + $0xc0] sm:$0xf]
    %v600 = vld [vmem:[%s5 + $0xc4] sm:$0xf]
    %v601 = vld [vmem:[%s5 + $0xc8] sm:$0xf]
    %v602 = vld [vmem:[%s5 + $0xcc] sm:$0xf]
    %v603 = vld [vmem:[%s5 + $0xd0] sm:$0xf]
    %v604 = vld [vmem:[%s5 + $0xd4] sm:$0xf]
    %v605 = vld [vmem:[%s5 + $0xd8] sm:$0xf]
    %v606 = vld [vmem:[%s5 + $0xdc] sm:$0xf]
    %v607 = vld [vmem:[%s5 + $0xe0] sm:$0xf]
    %v608 = vld [vmem:[%s5 + $0xe4] sm:$0xf]
    %v609 = vld [vmem:[%s5 + $0xe8] sm:$0xf]
    %v610 = vld [vmem:[%s5 + $0xec] sm:$0xf]
    %v611 = vld [vmem:[%s5 + $0xf0] sm:$0xf]
    %v612 = vld [vmem:[%s5 + $0xf4] sm:$0xf]
    %v613 = vld [vmem:[%s5 + $0xf8] sm:$0xf]
    %v614 = vld [vmem:[%s5 + $0xfc] sm:$0xf]
    %v615 = vlaneseq
    %v616 = vshrl.u32 %v615, 7
    %v617 = vsub.s32 0, %v616
    %v618 = vrot.slane %v32, %v617
    %v683 = vunpack.c.l.b16 %v551
    %v684 = vunpack.c.l.b16 %v552
    %v685 = vunpack.c.l.b16 %v553
    %v686 = vunpack.c.l.b16 %v554
    %v687 = vunpack.c.l.b16 %v555
    %v688 = vunpack.c.l.b16 %v556
    %v689 = vunpack.c.l.b16 %v557
    %v690 = vunpack.c.l.b16 %v558
    %v691 = vunpack.c.l.b16 %v559
    %v692 = vunpack.c.l.b16 %v560
    %v693 = vunpack.c.l.b16 %v561
    %v694 = vunpack.c.l.b16 %v562
    %v695 = vunpack.c.l.b16 %v563
    %v696 = vunpack.c.l.b16 %v564
    %v697 = vunpack.c.l.b16 %v565
    %v698 = vunpack.c.l.b16 %v566
    %v699 = vunpack.c.l.b16 %v567
    %v700 = vunpack.c.l.b16 %v568
    %v701 = vunpack.c.l.b16 %v569
    %v702 = vunpack.c.l.b16 %v570
    %v703 = vunpack.c.l.b16 %v571
    %v704 = vunpack.c.l.b16 %v572
    %v705 = vunpack.c.l.b16 %v573
    %v706 = vunpack.c.l.b16 %v574
    %v707 = vunpack.c.l.b16 %v575
    %v708 = vunpack.c.l.b16 %v576
    %v709 = vunpack.c.l.b16 %v577
    %v710 = vunpack.c.l.b16 %v578
    %v711 = vunpack.c.l.b16 %v579
    %v712 = vunpack.c.l.b16 %v580
    %v713 = vunpack.c.l.b16 %v581
    %v714 = vunpack.c.l.b16 %v582
    %v715 = vunpack.c.l.b16 %v583
    %v716 = vunpack.c.l.b16 %v584
    %v717 = vunpack.c.l.b16 %v585
    %v718 = vunpack.c.l.b16 %v586
    %v719 = vunpack.c.l.b16 %v587
    %v720 = vunpack.c.l.b16 %v588
    %v721 = vunpack.c.l.b16 %v589
    %v722 = vunpack.c.l.b16 %v590
    %v723 = vunpack.c.l.b16 %v591
    %v724 = vunpack.c.l.b16 %v592
    %v725 = vunpack.c.l.b16 %v593
    %v726 = vunpack.c.l.b16 %v594
    %v727 = vunpack.c.l.b16 %v595
    %v728 = vunpack.c.l.b16 %v596
    %v729 = vunpack.c.l.b16 %v597
    %v730 = vunpack.c.l.b16 %v598
    %v731 = vunpack.c.l.b16 %v599
    %v732 = vunpack.c.l.b16 %v600
    %v733 = vunpack.c.l.b16 %v601
    %v734 = vunpack.c.l.b16 %v602
    %v735 = vunpack.c.l.b16 %v603
    %v736 = vunpack.c.l.b16 %v604
    %v737 = vunpack.c.l.b16 %v605
    %v738 = vunpack.c.l.b16 %v606
    %v739 = vunpack.c.l.b16 %v607
    %v740 = vunpack.c.l.b16 %v608
    %v741 = vunpack.c.l.b16 %v609
    %v742 = vunpack.c.l.b16 %v610
    %v743 = vunpack.c.l.b16 %v611
    %v744 = vunpack.c.l.b16 %v612
    %v745 = vunpack.c.l.b16 %v613
    %v746 = vunpack.c.l.b16 %v614
    %v747 = vpack.c.b16 %v684, %v683
    %v748 = vpack.c.b16 %v686, %v685
    %v749 = vpack.c.b16 %v688, %v687
    %v750 = vpack.c.b16 %v690, %v689
    %v751 = vpack.c.b16 %v692, %v691
    %v752 = vpack.c.b16 %v694, %v693
    %v753 = vpack.c.b16 %v696, %v695
    %v754 = vpack.c.b16 %v698, %v697
    %v755 = vpack.c.b16 %v700, %v699
    %v756 = vpack.c.b16 %v702, %v701
    %v757 = vpack.c.b16 %v704, %v703
    %v758 = vpack.c.b16 %v706, %v705
    %v759 = vpack.c.b16 %v708, %v707
    %v760 = vpack.c.b16 %v710, %v709
    %v761 = vpack.c.b16 %v712, %v711
    %v762 = vpack.c.b16 %v714, %v713
    %v763 = vpack.c.b16 %v716, %v715
    %v764 = vpack.c.b16 %v718, %v717
    %v765 = vpack.c.b16 %v720, %v719
    %v766 = vpack.c.b16 %v722, %v721
    %v767 = vpack.c.b16 %v724, %v723
    %v768 = vpack.c.b16 %v726, %v725
    %v769 = vpack.c.b16 %v728, %v727
    %v770 = vpack.c.b16 %v730, %v729
    %v771 = vpack.c.b16 %v732, %v731
    %v772 = vpack.c.b16 %v734, %v733
    %v773 = vpack.c.b16 %v736, %v735
    %v774 = vpack.c.b16 %v738, %v737
    %v775 = vpack.c.b16 %v740, %v739
    %v776 = vpack.c.b16 %v742, %v741
    %v777 = vpack.c.b16 %v744, %v743
    %v778 = vpack.c.b16 %v746, %v745
    %811 = vmatprep.subr.bf16.mxu0 0
    %812 = vmatpush1.bf16.msra.mxu0 %v754
    %813 = vmatprep.subr.bf16.mxu0 0
    %814 = vmatpush1.bf16.msra.mxu0 %v753
    %815 = vmatprep.subr.bf16.mxu0 0
    %816 = vmatpush1.bf16.msra.mxu0 %v752
    %817 = vmatprep.subr.bf16.mxu0 0
    %818 = vmatpush1.bf16.msra.mxu0 %v751
    %819 = vmatprep.subr.bf16.mxu0 0
    %820 = vmatpush1.bf16.msra.mxu0 %v750
    %821 = vmatprep.subr.bf16.mxu0 0
    %822 = vmatpush1.bf16.msra.mxu0 %v749
    %823 = vmatprep.subr.bf16.mxu0 0
    %824 = vmatpush1.bf16.msra.mxu0 %v748
    %825 = vmatprep.subr.bf16.mxu0 0
    %826 = vmatpush1.bf16.msra.mxu0 %v747
    %827 = vmatprep.subr.bf16.mxu0 0
    %828 = vmatpush2.bf16.msra.mxu0 %v762
    %829 = vmatprep.subr.bf16.mxu0 0
    %830 = vmatpush2.bf16.msra.mxu0 %v761
    %831 = vmatprep.subr.bf16.mxu0 0
    %832 = vmatpush2.bf16.msra.mxu0 %v760
    %833 = vmatprep.subr.bf16.mxu0 0
    %834 = vmatpush2.bf16.msra.mxu0 %v759
    %835 = vmatprep.subr.bf16.mxu0 0
    %836 = vmatpush2.bf16.msra.mxu0 %v758
    %837 = vmatprep.subr.bf16.mxu0 0
    %838 = vmatpush2.bf16.msra.mxu0 %v757
    %839 = vmatprep.subr.bf16.mxu0 0
    %840 = vmatpush2.bf16.msra.mxu0 %v756
    %841 = vmatprep.subr.bf16.mxu0 0
    %842 = vmatpush2.bf16.msra.mxu0 %v755
    %843 = vmatprep.mubr.bf16.mxu0 %v548
    %844 = vmatmul.mubr.bf16.gmra.mxu0 %v547
    %v845 = vpop.f32.mrf.mxu0
    %v846 = vadd.f32 %v618, %v845
    %v847 = vpop.f32.mrf.mxu0
    %v848 = vpop.f32.mrf.mxu0
    %v849 = vpop.f32.mrf.mxu0
    %850 = vdwg.mxu0
    %851 = vmatprep.subr.bf16.mxu0 0
    %852 = vmatpush1.bf16.msra.mxu0 %v770
    %853 = vmatprep.subr.bf16.mxu0 0
    %854 = vmatpush1.bf16.msra.mxu0 %v769
    %855 = vmatprep.subr.bf16.mxu0 0
    %856 = vmatpush1.bf16.msra.mxu0 %v768
    %857 = vmatprep.subr.bf16.mxu0 0
    %858 = vmatpush1.bf16.msra.mxu0 %v767
    %859 = vmatprep.subr.bf16.mxu0 0
    %860 = vmatpush1.bf16.msra.mxu0 %v766
    %861 = vmatprep.subr.bf16.mxu0 0
    %862 = vmatpush1.bf16.msra.mxu0 %v765
    %863 = vmatprep.subr.bf16.mxu0 0
    %864 = vmatpush1.bf16.msra.mxu0 %v764
    %865 = vmatprep.subr.bf16.mxu0 0
    %866 = vmatpush1.bf16.msra.mxu0 %v763
    %867 = vmatprep.subr.bf16.mxu0 0
    %868 = vmatpush2.bf16.msra.mxu0 %v778
    %869 = vmatprep.subr.bf16.mxu0 0
    %870 = vmatpush2.bf16.msra.mxu0 %v777
    %871 = vmatprep.subr.bf16.mxu0 0
    %872 = vmatpush2.bf16.msra.mxu0 %v776
    %873 = vmatprep.subr.bf16.mxu0 0
    %874 = vmatpush2.bf16.msra.mxu0 %v775
    %875 = vmatprep.subr.bf16.mxu0 0
    %876 = vmatpush2.bf16.msra.mxu0 %v774
    %877 = vmatprep.subr.bf16.mxu0 0
    %878 = vmatpush2.bf16.msra.mxu0 %v773
    %879 = vmatprep.subr.bf16.mxu0 0
    %880 = vmatpush2.bf16.msra.mxu0 %v772
    %881 = vmatprep.subr.bf16.mxu0 0
    %882 = vmatpush2.bf16.msra.mxu0 %v771
    %883 = vmatprep.mubr.bf16.mxu0 %v550
    %884 = vmatmul.mubr.bf16.gmra.mxu0 %v549
    %v885 = vpop.f32.mrf.mxu0
    %v886 = vadd.f32 %v846, %v885
    %v887 = vpop.f32.mrf.mxu0
    %v888 = vpop.f32.mrf.mxu0
    %v889 = vpop.f32.mrf.mxu0
    %890 = vdwg.mxu0
    %v891 = vxor.u32 %v886, 2147483648
    %v892 = vmul.f32 %v891, 1.442695
    %v893 = vpow.pop %v892
    %v894 = vadd.f32 %v893, 1.0
    %v895 = vrcp.pop %v894
    %v896 = vmul.f32 1.0, %v895
    %897 = vst.msk [vmem:[#allocation2] sm:$0xff] %vm104, %v896
    %899 = vrot.lane.b32.xlu0 %v399, 32
    %v900 = vpop.permute.xlu0 %899
    %vm902 = vcmask 523520
    %903 = vst.msk [vmem:[#allocation2] sm:$0xff] %vm902, %v900
    // Predicated region
    $region30: #{tpu_custom_call.1} parent=1 // pred_check
      _
    $region31: #{tpu_custom_call.1} parent=1 // pred_check_branch
      %905 = sbr.rel (0) target = $region33
    $region32: #{tpu_custom_call.1} parent=1 // pred_region
      %s907 = ssub.s32 128, 128
      %908 = vsyncadd [#allocation3], %s907
      %s910 = sshll.u32 [#allocation2], 4
      %s911 = int_to_ptr.vmem [resolvable:$true] %s910
      %913 = dma.vmem_to_hbm [thread:$0]  %s911, 128, %s7, [#allocation3]
    $region33: #{tpu_custom_call.1} parent=1 // pred_fallthru
      _
    // Predicated region
    $region34: #{tpu_custom_call.1} parent=1 // pred_check
      _
    $region35: #{tpu_custom_call.1} parent=1 // pred_check_branch
      %915 = sbr.rel (0) target = $region37
    $region36: #{tpu_custom_call.1} parent=1 // pred_region
      %916 = dma.done [#allocation3], 128
    $region37: #{tpu_custom_call.1} parent=1 // pred_fallthru
      _
    %917 = vsyncpa [#allocation3], 1

</llo_original>
